<compile_context>
chip_gen: v6e
topology: v6e:2x2x1
jax: 0.10.0
libtpu: 0.0.40
codegen_flags: <defaults>
</compile_context>

<pallas_src>
import functools

import jax
import jax.numpy as jnp
from jax import lax
from jax.experimental import pallas as pl
from jax.experimental.pallas import tpu as pltpu

F = 128                      # lane-padded feature width (all dims <= 128 here)
MM_DTYPE = jnp.bfloat16      # MXU operand dtype (accumulation stays f32)


# ----------------------------------------------------------------------------
# Shared in-kernel helpers (operate on 2-D (M, F) slabs, f32 in / f32 out)
# ----------------------------------------------------------------------------
def _attention(x, w1, w2, w3, b1, b2, b3_masked):
    """ReLU-MLP + masked softmax * 41.  b3_masked carries -1e30 in pad lanes."""
    f32 = jnp.float32
    h = jnp.maximum(
        jnp.dot(x.astype(MM_DTYPE), w1, preferred_element_type=f32) + b1, 0.0)
    h = jnp.maximum(
        jnp.dot(h.astype(MM_DTYPE), w2, preferred_element_type=f32) + b2, 0.0)
    logits = jnp.dot(h.astype(MM_DTYPE), w3, preferred_element_type=f32) + b3_masked
    logits = logits - jnp.max(logits, axis=1, keepdims=True)
    e = jnp.exp(logits)
    # exact reciprocal: the denominator is only (M,1) and feeds the recurrence.
    return e * (41.0 / jnp.sum(e, axis=1, keepdims=True))


def _mtrnn_step(temp, u, wmx, wmh, wo, alpha, one_m_alpha, b_m, b_o):
    """One leaky-integrator MTRNN step on packed potentials u (B, F)."""
    f32 = jnp.float32
    h = jnp.tanh(u)
    pre = (jnp.dot(temp.astype(MM_DTYPE), wmx, preferred_element_type=f32)
           + jnp.dot(h.astype(MM_DTYPE), wmh, preferred_element_type=f32)
           + b_m)
    u_new = one_m_alpha * u + alpha * pre
    y = jnp.tanh(jnp.dot(jnp.tanh(u_new).astype(MM_DTYPE), wo,
                         preferred_element_type=f32) + b_o)
    return u_new, y


# ----------------------------------------------------------------------------
# Kernel 1: gated path (open_rate != 1.0) — attention inline in the recurrence
# ----------------------------------------------------------------------------
def _gated_seq_kernel(x_ref, u0_ref, ly0_ref, wattn_ref, battn_ref,
                      wmx_ref, wmh_ref, wo_ref, misc_ref,
                      y_ref, attn_ref, state_ref,
                      ly_scr,
                      *, tc, t_total, open_rate):
    c = pl.program_id(0)

    @pl.when(c == 0)
    def _():
        state_ref[...] = u0_ref[...]
        ly_scr[...] = ly0_ref[...]

    # Hoist small (1,F) biases (broadcast once, not per step).  Big weights are
    # read inside the step: they stream from VMEM into the MXU either way.
    bshape = (x_ref.shape[1], F)
    b1 = jnp.broadcast_to(battn_ref[0:1, :], bshape)
    b2 = jnp.broadcast_to(battn_ref[1:2, :], bshape)
    b3m = jnp.broadcast_to(battn_ref[2:3, :], bshape)
    alpha = jnp.broadcast_to(misc_ref[0:1, :], bshape)
    b_m = jnp.broadcast_to(misc_ref[1:2, :], bshape)
    b_o = jnp.broadcast_to(misc_ref[2:3, :], bshape)
    one_m_alpha = 1.0 - alpha
    gate = 1.0 - open_rate            # constant (t==0 handled via ly0 on host)

    def step(t, carry):
        u, ly = carry
        x = x_ref[t] * open_rate + ly * gate
        attn = _attention(x, wattn_ref[0], wattn_ref[1], wattn_ref[2],
                          b1, b2, b3m)
        u_new, y = _mtrnn_step(x * attn, u, wmx_ref[...], wmh_ref[...],
                               wo_ref[...], alpha, one_m_alpha, b_m, b_o)
        y_ref[t] = y
        attn_ref[t] = attn
        if t_total % tc != 0:          # only needed when T was padded
            m = ((c * tc + t) < t_total).astype(jnp.float32)
            u_new = u + m * (u_new - u)
            y = ly + m * (y - ly)
        return u_new, y

    u, ly = lax.fori_loop(0, tc, step, (state_ref[...], ly_scr[...]),
                          unroll=(tc <= 8))
    state_ref[...] = u
    ly_scr[...] = ly


# ----------------------------------------------------------------------------
# Kernel 2a: fast path (open_rate == 1.0) — attention for all T in one
# parallel pass (megacore-shardable on v7x)
# ----------------------------------------------------------------------------
def _attn_precompute_kernel(x_ref, wattn_ref, battn_ref, attn_ref, temp_ref):
    tc, b, f = x_ref.shape
    x = x_ref[...].reshape(tc * b, f)
    attn = _attention(x, wattn_ref[0], wattn_ref[1], wattn_ref[2],
                      battn_ref[0:1, :], battn_ref[1:2, :], battn_ref[2:3, :])
    attn_ref[...] = attn.reshape(tc, b, f)
    temp_ref[...] = (x * attn).reshape(tc, b, f)


# ----------------------------------------------------------------------------
# Kernel 2b: fast path recurrence — MTRNN only, consumes precomputed temp
# ----------------------------------------------------------------------------
def _fast_seq_kernel(temp_ref, u0_ref, wmx_ref, wmh_ref, wo_ref, misc_ref,
                     y_ref, state_ref, *, tc, t_total):
    c = pl.program_id(0)

    @pl.when(c == 0)
    def _():
        state_ref[...] = u0_ref[...]

    bshape = (temp_ref.shape[1], F)
    alpha = jnp.broadcast_to(misc_ref[0:1, :], bshape)
    b_m = jnp.broadcast_to(misc_ref[1:2, :], bshape)
    b_o = jnp.broadcast_to(misc_ref[2:3, :], bshape)
    one_m_alpha = 1.0 - alpha

    def step(t, u):
        u_new, y = _mtrnn_step(temp_ref[t], u, wmx_ref[...], wmh_ref[...],
                               wo_ref[...], alpha, one_m_alpha, b_m, b_o)
        y_ref[t] = y
        if t_total % tc != 0:
            m = ((c * tc + t) < t_total).astype(jnp.float32)
            u_new = u + m * (u_new - u)
        return u_new

    u = lax.fori_loop(0, tc, step, state_ref[...], unroll=(tc <= 8))
    state_ref[...] = u


# ----------------------------------------------------------------------------
# Host-side parameter packing (pad + fuse into a few lane-dense tensors)
# ----------------------------------------------------------------------------
def _pad2(a, rows, cols):
    out = jnp.zeros((rows, cols), jnp.float32)
    return out.at[: a.shape[0], : a.shape[1]].set(a)


def pack_params(params, n_in, n_out, n_io, n_cf, n_cs, tau):
    assert n_io + n_cf + n_cs <= F and n_in <= F and n_out <= F
    wattn = jnp.stack([_pad2(params["w1"], F, F),
                       _pad2(params["w2"], F, F),
                       _pad2(params["w3"], F, F)]).astype(MM_DTYPE)
    # Pre-fold the padded-lane softmax mask into the b3 row (stays f32).
    b3 = _pad2(params["b3"], 1, F)[0]
    b3 = jnp.where(jnp.arange(F) < n_in, b3, -1e30)
    battn = jnp.stack([_pad2(params["b1"], 1, F)[0],
                       _pad2(params["b2"], 1, F)[0], b3])

    o_io, o_cf, o_cs = 0, n_io, n_io + n_cf
    # K=128 split of the fused MTRNN matmul: pre = temp@wm_x + tanh(u)@wm_h + b_m
    wm_x = jnp.zeros((F, F), jnp.float32)
    wm_x = wm_x.at[0:n_in, o_io:o_io + n_io].set(params["w_i2io"])
    wm_h = jnp.zeros((F, F), jnp.float32)
    wm_h = wm_h.at[o_io:o_io + n_io, o_io:o_io + n_io].set(params["w_io2io"])
    wm_h = wm_h.at[o_io:o_io + n_io, o_cf:o_cf + n_cf].set(params["w_io2cf"])
    wm_h = wm_h.at[o_cf:o_cf + n_cf, o_io:o_io + n_io].set(params["w_cf2io"])
    wm_h = wm_h.at[o_cf:o_cf + n_cf, o_cf:o_cf + n_cf].set(params["w_cf2cf"])
    wm_h = wm_h.at[o_cf:o_cf + n_cf, o_cs:o_cs + n_cs].set(params["w_cf2cs"])
    wm_h = wm_h.at[o_cs:o_cs + n_cs, o_cf:o_cf + n_cf].set(params["w_cs2cf"])
    wm_h = wm_h.at[o_cs:o_cs + n_cs, o_cs:o_cs + n_cs].set(params["w_cs2cs"])
    wo = _pad2(params["w_io2o"], F, F)

    alpha = jnp.zeros((F,), jnp.float32)
    alpha = alpha.at[o_io:o_io + n_io].set(1.0 / tau[0])
    alpha = alpha.at[o_cf:o_cf + n_cf].set(1.0 / tau[1])
    alpha = alpha.at[o_cs:o_cs + n_cs].set(1.0 / tau[2])
    b_m = jnp.zeros((F,), jnp.float32)
    b_m = b_m.at[o_io:o_io + n_io].set(
        (params["b_i2io"] + params["b_io2io"] + params["b_cf2io"])[0])
    b_m = b_m.at[o_cf:o_cf + n_cf].set(
        (params["b_io2cf"] + params["b_cf2cf"] + params["b_cs2cf"])[0])
    b_m = b_m.at[o_cs:o_cs + n_cs].set(
        (params["b_cf2cs"] + params["b_cs2cs"])[0])
    b_o = jnp.zeros((F,), jnp.float32).at[:n_out].set(params["b_io2o"][0])
    misc = jnp.stack([alpha, b_m, b_o])

    return {"wattn": wattn, "battn": battn,
            "wm_x": wm_x.astype(MM_DTYPE), "wm_h": wm_h.astype(MM_DTYPE),
            "wo": wo.astype(MM_DTYPE), "misc": misc}


# ----------------------------------------------------------------------------
# Wrapper: whole sequence, chunked time loop
# ----------------------------------------------------------------------------
def gated_mtrnn_forward_seq(packed, xs, state, last_output=None, open_rate=1.0,
                            *, n_in, n_out, n_io, n_cf, n_cs, time_chunk=32):
    T, B, _ = xs.shape
    B_pad = -(-B // 8) * 8
    # time_chunk=32 keeps per-chunk streaming well under v5e's 16 MiB scoped
    # VMEM (and v7x's 64 MiB physical); weights are ~0.2 MiB resident.
    tc = max(1, min(time_chunk, T))
    n_chunks = pl.cdiv(T, tc)
    T_pad = n_chunks * tc
    o_io, o_cf, o_cs = 0, n_io, n_io + n_cf

    xs_p = jnp.zeros((T_pad, B_pad, F), jnp.float32).at[:T, :B, :n_in].set(xs)
    u_io, u_cf, u_cs = state
    u0 = jnp.zeros((B_pad, F), jnp.float32)
    u0 = u0.at[:B, o_io:o_io + n_io].set(u_io)
    u0 = u0.at[:B, o_cf:o_cf + n_cf].set(u_cf)
    u0 = u0.at[:B, o_cs:o_cs + n_cs].set(u_cs)

    const2 = lambda shape: pl.BlockSpec(shape, lambda c: (0, 0))
    const3 = lambda shape: pl.BlockSpec(shape, lambda c: (0, 0, 0))
    seq_spec = pl.BlockSpec((tc, B_pad, F), lambda c: (c, 0, 0))
    seq_shape = jax.ShapeDtypeStruct((T_pad, B_pad, F), jnp.float32)
    state_shape = jax.ShapeDtypeStruct((B_pad, F), jnp.float32)

    if float(open_rate) == 1.0:
        # Fast path: gating is a no-op, attention does not depend on the
        # recurrence -> one parallel pass for attn/temp, lean recurrence after.
        attn_p, temp_full = pl.pallas_call(
            _attn_precompute_kernel,
            grid_spec=pltpu.PrefetchScalarGridSpec(
                num_scalar_prefetch=0, grid=(n_chunks,),
                in_specs=[seq_spec, const3((3, F, F)), const2((3, F))],
                out_specs=[seq_spec, seq_spec]),
            out_shape=(seq_shape, seq_shape),
            compiler_params=pltpu.CompilerParams(
                dimension_semantics=("parallel",)),
        )(xs_p, packed["wattn"], packed["battn"])

        ys_p, u_final = pl.pallas_call(
            functools.partial(_fast_seq_kernel, tc=tc, t_total=T),
            grid_spec=pltpu.PrefetchScalarGridSpec(
                num_scalar_prefetch=0, grid=(n_chunks,),
                in_specs=[seq_spec, const2((B_pad, F)),
                          const2((F, F)), const2((F, F)), const2((F, F)),
                          const2((3, F))],
                out_specs=[seq_spec, const2((B_pad, F))]),
            out_shape=(seq_shape, state_shape),
            compiler_params=pltpu.CompilerParams(
                dimension_semantics=("arbitrary",)),      # serial recurrence
        )(temp_full, u0, packed["wm_x"], packed["wm_h"], packed["wo"],
          packed["misc"])
    else:
        # Uniform gate trick: with no stored last_output, set ly0 = x[0] so
        # open_rate*x0 + (1-open_rate)*x0 == x0 (no per-step t==0 select).
        if last_output is None:
            ly0 = xs_p[0]
        else:
            ly0 = jnp.zeros((B_pad, F), jnp.float32).at[:B, :n_out].set(last_output)

        ys_p, attn_p, u_final = pl.pallas_call(
            functools.partial(_gated_seq_kernel, tc=tc, t_total=T,
                              open_rate=float(open_rate)),
            grid_spec=pltpu.PrefetchScalarGridSpec(
                num_scalar_prefetch=0, grid=(n_chunks,),
                in_specs=[seq_spec, const2((B_pad, F)), const2((B_pad, F)),
                          const3((3, F, F)), const2((3, F)),
                          const2((F, F)), const2((F, F)), const2((F, F)),
                          const2((3, F))],
                out_specs=[seq_spec, seq_spec, const2((B_pad, F))],
                scratch_shapes=[pltpu.VMEM((B_pad, F), jnp.float32)]),
            out_shape=(seq_shape, seq_shape, state_shape),
            compiler_params=pltpu.CompilerParams(
                dimension_semantics=("arbitrary",)),
        )(xs_p, u0, ly0, packed["wattn"], packed["battn"],
          packed["wm_x"], packed["wm_h"], packed["wo"], packed["misc"])

    ys = ys_p[:T, :B, :n_out]
    attns = attn_p[:T, :B, :n_in]
    new_state = (u_final[:B, o_io:o_io + n_io],
                 u_final[:B, o_cf:o_cf + n_cf],
                 u_final[:B, o_cs:o_cs + n_cs])
    return ys, attns, new_state


# ----------------------------------------------------------------------------
# Pure-JAX reference (matmul_dtype=bf16 matches the kernel's MXU operand
# precision exactly; matmul_dtype=f32 is the faithful-f32 module semantics)
# ----------------------------------------------------------------------------
def _reference_step(params, x, state, last_output, open_rate, tau, mm_dtype):
    def mm(a, w):
        return jnp.dot(a.astype(mm_dtype), w.astype(mm_dtype),
                       preferred_element_type=jnp.float32)
    if last_output is not None:
        x = open_rate * x + last_output * (1.0 - open_rate)
    h1 = jax.nn.relu(mm(x, params["w1"]) + params["b1"])
    h2 = jax.nn.relu(mm(h1, params["w2"]) + params["b2"])
    attn = jax.nn.softmax(mm(h2, params["w3"]) + params["b3"], axis=1) * 41.0
    temp = x * attn
    u_io, u_cf, u_cs = state
    h_io, h_cf, h_cs = jnp.tanh(u_io), jnp.tanh(u_cf), jnp.tanh(u_cs)
    pre_io = (mm(temp, params["w_i2io"]) + params["b_i2io"]
              + mm(h_io, params["w_io2io"]) + params["b_io2io"]
              + mm(h_cf, params["w_cf2io"]) + params["b_cf2io"])
    pre_cf = (mm(h_io, params["w_io2cf"]) + params["b_io2cf"]
              + mm(h_cf, params["w_cf2cf"]) + params["b_cf2cf"]
              + mm(h_cs, params["w_cs2cf"]) + params["b_cs2cf"])
    pre_cs = (mm(h_cf, params["w_cf2cs"]) + params["b_cf2cs"]
              + mm(h_cs, params["w_cs2cs"]) + params["b_cs2cs"])
    u_io_n = (1 - 1 / tau[0]) * u_io + (1 / tau[0]) * pre_io
    u_cf_n = (1 - 1 / tau[1]) * u_cf + (1 / tau[1]) * pre_cf
    u_cs_n = (1 - 1 / tau[2]) * u_cs + (1 / tau[2]) * pre_cs
    y = jnp.tanh(mm(jnp.tanh(u_io_n), params["w_io2o"]) + params["b_io2o"])
    return y, attn, (u_io_n, u_cf_n, u_cs_n)


def _reference_seq(params, xs, state, last_output, open_rate, tau, mm_dtype):
    ys, attns = [], []
    for t in range(xs.shape[0]):
        y, a, state = _reference_step(params, xs[t], state, last_output,
                                      open_rate, tau, mm_dtype)
        last_output = y
        ys.append(y)
        attns.append(a)
    return jnp.stack(ys), jnp.stack(attns), state


# ----------------------------------------------------------------------------
# Deterministic parameter construction (weights stored as (fan_in, fan_out))
# ----------------------------------------------------------------------------
_PARAM_ORDER = [
    "w1", "b1", "w2", "b2", "w3", "b3",
    "w_i2io", "b_i2io", "w_io2io", "b_io2io", "w_cf2io", "b_cf2io",
    "w_io2cf", "b_io2cf", "w_cf2cf", "b_cf2cf", "w_cs2cf", "b_cs2cf",
    "w_cf2cs", "b_cf2cs", "w_cs2cs", "b_cs2cs",
    "w_io2o", "b_io2o",
]


def make_params(key, n_in, n_out, n_io, n_cf, n_cs, hidden=100):
    shapes = {
        "w1": (n_in, hidden), "b1": (1, hidden),
        "w2": (hidden, hidden), "b2": (1, hidden),
        "w3": (hidden, n_in), "b3": (1, n_in),
        "w_i2io": (n_in, n_io), "b_i2io": (1, n_io),
        "w_io2io": (n_io, n_io), "b_io2io": (1, n_io),
        "w_cf2io": (n_cf, n_io), "b_cf2io": (1, n_io),
        "w_io2cf": (n_io, n_cf), "b_io2cf": (1, n_cf),
        "w_cf2cf": (n_cf, n_cf), "b_cf2cf": (1, n_cf),
        "w_cs2cf": (n_cs, n_cf), "b_cs2cf": (1, n_cf),
        "w_cf2cs": (n_cf, n_cs), "b_cf2cs": (1, n_cs),
        "w_cs2cs": (n_cs, n_cs), "b_cs2cs": (1, n_cs),
        "w_io2o": (n_io, n_out), "b_io2o": (1, n_out),
    }
    params = {}
    keys = jax.random.split(key, len(_PARAM_ORDER))
    for k, name in zip(keys, _PARAM_ORDER):
        fan_in = shapes[name][0] if name.startswith("w") else shapes[name][1]
        scale = 1.0 / jnp.sqrt(jnp.float32(fan_in))
        params[name] = scale * jax.random.normal(k, shapes[name], jnp.float32)
    return params


# ----------------------------------------------------------------------------
if __name__ == "__main__":
    B, N_IN, N_OUT, N_IO, N_CF, N_CS, HID = 2, 8, 8, 16, 16, 16, 100
    T = 6
    TAU = (2.0, 5.0, 70.0)

    key = jax.random.PRNGKey(0)
    kp, kx = jax.random.split(key)
    params = make_params(kp, N_IN, N_OUT, N_IO, N_CF, N_CS, HID)
    xs = jax.random.normal(kx, (T, B, N_IN), jnp.float32)

    # init_state(batch_size): zero internal potentials, last_output = None.
    state0 = (jnp.zeros((B, N_IO), jnp.float32),
              jnp.zeros((B, N_CF), jnp.float32),
              jnp.zeros((B, N_CS), jnp.float32))
    packed = pack_params(params, N_IN, N_OUT, N_IO, N_CF, N_CS, TAU)
    kw = dict(n_in=N_IN, n_out=N_OUT, n_io=N_IO, n_cf=N_CF, n_cs=N_CS)

    # open_rate=1.0 exercises the fast (hoisted-attention) path (module default);
    # open_rate=0.5 exercises the gated recurrent path.
    for open_rate in (1.0, 0.5):
        ys, attns, st = gated_mtrnn_forward_seq(
            packed, xs, state0, last_output=None, open_rate=open_rate, **kw)
        jax.block_until_ready((ys, attns, st))
        assert ys.shape == (T, B, N_OUT) and attns.shape == (T, B, N_IN)

        # Tight check vs. a reference using the same bf16 MXU operand precision.
        r_ys, r_attns, r_st = _reference_seq(params, xs, state0, None,
                                             open_rate, TAU, MM_DTYPE)
        assert jnp.allclose(ys, r_ys, atol=5e-3, rtol=5e-3), \
            f"output mismatch (open_rate={open_rate})"
        assert jnp.allclose(attns, r_attns, atol=5e-3, rtol=5e-3), \
            f"attention mismatch (open_rate={open_rate})"
        for a, b in zip(st, r_st):
            assert jnp.allclose(a, b, atol=5e-3, rtol=5e-3), \
                f"state mismatch (open_rate={open_rate})"

        # Loose sanity check vs. the exact-f32 module semantics (bounds the
        # drift introduced by bf16 matmul operands over the sequence).
        f_ys, f_attns, _ = _reference_seq(params, xs, state0, None,
                                          open_rate, TAU, jnp.float32)
        assert jnp.allclose(ys, f_ys, atol=8e-2, rtol=8e-2), \
            f"f32 drift too large (open_rate={open_rate})"
        assert jnp.allclose(attns, f_attns, atol=8e-2, rtol=8e-2), \
            f"f32 attention drift too large (open_rate={open_rate})"

    print("KERNEL_OK")
</pallas_src>

<mosaic_0001>
module attributes {stable_mosaic.version = 11 : i64} {
  func.func @_attn_precompute_kernel(%arg0: i32, %arg1: memref<6x8x128xf32, #tpu.memory_space<vmem>>, %arg2: memref<3x128x128xbf16, #tpu.memory_space<vmem>>, %arg3: memref<3x128xf32, #tpu.memory_space<vmem>>, %arg4: memref<6x8x128xf32, #tpu.memory_space<vmem>>, %arg5: memref<6x8x128xf32, #tpu.memory_space<vmem>>) attributes {dimension_semantics = [#tpu.dimension_semantics<parallel>], iteration_bounds = array<i64: 1>, scalar_prefetch = 0 : i64, scratch_operands = 0 : i64, tpu.core_type = #tpu.core_type<tc>, window_params = [{transform_indices = @transform_0, window_bounds = array<i64: 6, 8, 128>}, {pipeline_mode = #tpu.pipeline_mode<synchronous>, transform_indices = @transform_1, window_bounds = array<i64: 3, 128, 128>}, {pipeline_mode = #tpu.pipeline_mode<synchronous>, transform_indices = @transform_2, window_bounds = array<i64: 3, 128>}, {transform_indices = @transform_3, window_bounds = array<i64: 6, 8, 128>}, {transform_indices = @transform_4, window_bounds = array<i64: 6, 8, 128>}]} {
    %c0 = arith.constant 0 : index
    %c0_0 = arith.constant 0 : index
    %c0_1 = arith.constant 0 : index
    %0 = vector.load %arg1[%c0, %c0_0, %c0_1] : memref<6x8x128xf32, #tpu.memory_space<vmem>>, vector<6x8x128xf32>
    %1 = vector.shape_cast %0 : vector<6x8x128xf32> to vector<48x128xf32>
    %c0_2 = arith.constant 0 : index
    %c0_3 = arith.constant 0 : index
    %c0_4 = arith.constant 0 : index
    %2 = vector.load %arg2[%c0_2, %c0_3, %c0_4] : memref<3x128x128xbf16, #tpu.memory_space<vmem>>, vector<1x128x128xbf16>
    %3 = vector.shape_cast %2 : vector<1x128x128xbf16> to vector<128x128xbf16>
    %c1 = arith.constant 1 : index
    %c0_5 = arith.constant 0 : index
    %c0_6 = arith.constant 0 : index
    %4 = vector.load %arg2[%c1, %c0_5, %c0_6] : memref<3x128x128xbf16, #tpu.memory_space<vmem>>, vector<1x128x128xbf16>
    %5 = vector.shape_cast %4 : vector<1x128x128xbf16> to vector<128x128xbf16>
    %c2 = arith.constant 2 : index
    %c0_7 = arith.constant 0 : index
    %c0_8 = arith.constant 0 : index
    %6 = vector.load %arg2[%c2, %c0_7, %c0_8] : memref<3x128x128xbf16, #tpu.memory_space<vmem>>, vector<1x128x128xbf16>
    %7 = vector.shape_cast %6 : vector<1x128x128xbf16> to vector<128x128xbf16>
    %c0_9 = arith.constant 0 : index
    %c0_10 = arith.constant 0 : index
    %8 = vector.load %arg3[%c0_9, %c0_10] : memref<3x128xf32, #tpu.memory_space<vmem>>, vector<1x128xf32>
    %c1_11 = arith.constant 1 : index
    %c0_12 = arith.constant 0 : index
    %9 = vector.load %arg3[%c1_11, %c0_12] : memref<3x128xf32, #tpu.memory_space<vmem>>, vector<1x128xf32>
    %c2_13 = arith.constant 2 : index
    %c0_14 = arith.constant 0 : index
    %10 = vector.load %arg3[%c2_13, %c0_14] : memref<3x128xf32, #tpu.memory_space<vmem>>, vector<1x128xf32>
    %11 = arith.truncf %1 : vector<48x128xf32> to vector<48x128xbf16>
    %cst = arith.constant dense<0.000000e+00> : vector<48x128xf32>
    %12 = tpu.matmul %11, %3, %cst {dimension_numbers = #tpu.dot_dimension_numbers<[1], [0], [0], [1], [0, 0, 1, 1], [], []>} : vector<48x128xbf16>, vector<128x128xbf16>, vector<48x128xf32> -> vector<48x128xf32>
    %13 = vector.broadcast %8 : vector<1x128xf32> to vector<48x128xf32>
    %14 = arith.addf %12, %13 : vector<48x128xf32>
    %cst_15 = arith.constant 0.000000e+00 : f32
    %15 = vector.broadcast %cst_15 : f32 to vector<48x128xf32>
    %16 = arith.maximumf %14, %15 : vector<48x128xf32>
    %17 = arith.truncf %16 : vector<48x128xf32> to vector<48x128xbf16>
    %cst_16 = arith.constant dense<0.000000e+00> : vector<48x128xf32>
    %18 = tpu.matmul %17, %5, %cst_16 {dimension_numbers = #tpu.dot_dimension_numbers<[1], [0], [0], [1], [0, 0, 1, 1], [], []>} : vector<48x128xbf16>, vector<128x128xbf16>, vector<48x128xf32> -> vector<48x128xf32>
    %19 = vector.broadcast %9 : vector<1x128xf32> to vector<48x128xf32>
    %20 = arith.addf %18, %19 : vector<48x128xf32>
    %cst_17 = arith.constant 0.000000e+00 : f32
    %21 = vector.broadcast %cst_17 : f32 to vector<48x128xf32>
    %22 = arith.maximumf %20, %21 : vector<48x128xf32>
    %23 = arith.truncf %22 : vector<48x128xf32> to vector<48x128xbf16>
    %cst_18 = arith.constant dense<0.000000e+00> : vector<48x128xf32>
    %24 = tpu.matmul %23, %7, %cst_18 {dimension_numbers = #tpu.dot_dimension_numbers<[1], [0], [0], [1], [0, 0, 1, 1], [], []>} : vector<48x128xbf16>, vector<128x128xbf16>, vector<48x128xf32> -> vector<48x128xf32>
    %25 = vector.broadcast %10 : vector<1x128xf32> to vector<48x128xf32>
    %26 = arith.addf %24, %25 : vector<48x128xf32>
    %cst_19 = arith.constant dense<0xFF800000> : vector<48xf32>
    %27 = vector.multi_reduction <maximumf>, %26, %cst_19 [1] : vector<48x128xf32> to vector<48xf32>
    %28 = vector.shape_cast %27 : vector<48xf32> to vector<48x1xf32>
    %29 = vector.broadcast %28 : vector<48x1xf32> to vector<48x128xf32>
    %30 = arith.subf %26, %29 : vector<48x128xf32>
    %31 = math.exp %30 : vector<48x128xf32>
    %cst_20 = arith.constant dense<0.000000e+00> : vector<48xf32>
    %32 = vector.multi_reduction <add>, %31, %cst_20 [1] : vector<48x128xf32> to vector<48xf32>
    %33 = vector.shape_cast %32 : vector<48xf32> to vector<48x1xf32>
    %cst_21 = arith.constant 4.100000e+01 : f32
    %34 = vector.broadcast %cst_21 : f32 to vector<48x1xf32>
    %35 = arith.divf %34, %33 : vector<48x1xf32>
    %36 = vector.broadcast %35 : vector<48x1xf32> to vector<48x128xf32>
    %37 = arith.mulf %31, %36 : vector<48x128xf32>
    %38 = vector.shape_cast %37 : vector<48x128xf32> to vector<6x8x128xf32>
    %c0_22 = arith.constant 0 : index
    %c0_23 = arith.constant 0 : index
    %c0_24 = arith.constant 0 : index
    %39 = vector.load %arg4[%c0_22, %c0_23, %c0_24] : memref<6x8x128xf32, #tpu.memory_space<vmem>>, vector<6x8x128xf32>
    tpu.vector_store %arg4[%c0_22, %c0_23, %c0_24], %38 {strides = array<i32>} : memref<6x8x128xf32, #tpu.memory_space<vmem>>, vector<6x8x128xf32>,
    %40 = arith.mulf %1, %37 : vector<48x128xf32>
    %41 = vector.shape_cast %40 : vector<48x128xf32> to vector<6x8x128xf32>
    %c0_25 = arith.constant 0 : index
    %c0_26 = arith.constant 0 : index
    %c0_27 = arith.constant 0 : index
    %42 = vector.load %arg5[%c0_25, %c0_26, %c0_27] : memref<6x8x128xf32, #tpu.memory_space<vmem>>, vector<6x8x128xf32>
    tpu.vector_store %arg5[%c0_25, %c0_26, %c0_27], %41 {strides = array<i32>} : memref<6x8x128xf32, #tpu.memory_space<vmem>>, vector<6x8x128xf32>,
    return
  }
  func.func @transform_0(%arg0: i32) -> (i32, i32, i32) {
    %c0_i32 = arith.constant 0 : i32
    %c0_i32_0 = arith.constant 0 : i32
    %c0_i32_1 = arith.constant 0 : i32
    return %arg0, %c0_i32, %c0_i32_0 : i32, i32, i32
  }
  func.func @transform_1(%arg0: i32) -> (i32, i32, i32) {
    %c0_i32 = arith.constant 0 : i32
    %c0_i32_0 = arith.constant 0 : i32
    %c0_i32_1 = arith.constant 0 : i32
    %c0_i32_2 = arith.constant 0 : i32
    return %c0_i32, %c0_i32_0, %c0_i32_1 : i32, i32, i32
  }
  func.func @transform_2(%arg0: i32) -> (i32, i32) {
    %c0_i32 = arith.constant 0 : i32
    %c0_i32_0 = arith.constant 0 : i32
    %c0_i32_1 = arith.constant 0 : i32
    return %c0_i32, %c0_i32_0 : i32, i32
  }
  func.func @transform_3(%arg0: i32) -> (i32, i32, i32) {
    %c0_i32 = arith.constant 0 : i32
    %c0_i32_0 = arith.constant 0 : i32
    %c0_i32_1 = arith.constant 0 : i32
    return %arg0, %c0_i32, %c0_i32_0 : i32, i32, i32
  }
  func.func @transform_4(%arg0: i32) -> (i32, i32, i32) {
    %c0_i32 = arith.constant 0 : i32
    %c0_i32_0 = arith.constant 0 : i32
    %c0_i32_1 = arith.constant 0 : i32
    return %arg0, %c0_i32, %c0_i32_0 : i32, i32, i32
  }
}

</mosaic_0001>

<llo_original>
// kernel: tpu_custom_call.1
$region0: #{tpu_custom_call.1}
  #allocation0 [shape = 'u32[]', space=smem, size = 0x4, offset = 0x4, fixed_abs, tag = 'smem constant byte address 0x4 - core index']
  #allocation1 [shape = 'u32[144,128]{1,0:T(1,128)}', space=vmem, size = 0x12000, scoped, tag = 'internal scratch']
  %s0 = inlined_call_operand.hbm [shape: f32[6,8,128], index: 0, kind: input, shape index: {}]
  %s1 = inlined_call_operand.hbm [shape: bf16[3,128,128], index: 1, kind: input, shape index: {}]
  %s2 = inlined_call_operand.hbm [shape: f32[3,128], index: 2, kind: input, shape index: {}]
  %s3 = inlined_call_operand.hbm [shape: f32[6,8,128], index: 3, kind: output, shape index: {0}]
  %s4 = inlined_call_operand.hbm [shape: f32[6,8,128], index: 4, kind: output, shape index: {1}]
  %5 = xla_tuple %s3, %s4
  %s6 = sld [smem:[#allocation0]]
  $region42: #{tpu_custom_call.1} parent=0
    _
  %s8 = ssub.s32 1, %s6
  %s9 = scalar_select 0, %s8, %s6
  $region1: #{tpu_custom_call.1} parent=0
    #allocation2 [shape = 'u8[24576]{0}', space=vmem, size = 0x6000, scoped, tag = 'input window, operand 0, single buffered']
    #allocation3 [shape = 's32[1]{0}', space=sflag, size = 0x4, scoped, tag = 'scoped memory for tpu_custom_call.1']
    #allocation4 [shape = 's32[1]{0}', space=sflag, size = 0x4, scoped, tag = 'scoped memory for tpu_custom_call.1']
    #allocation5 [shape = 'u8[98304]{0}', space=vmem, size = 0x18000, scoped, tag = 'input window, operand 1, single buffered']
    #allocation6 [shape = 's32[1]{0}', space=sflag, size = 0x4, scoped, tag = 'scoped memory for tpu_custom_call.1']
    #allocation7 [shape = 'u8[2048]{0}', space=vmem, size = 0x800, scoped, tag = 'input window, operand 2, single buffered']
    #allocation8 [shape = 'u8[24576]{0}', space=vmem, size = 0x6000, scoped, tag = 'output window, operand 0, single buffered']
    #allocation9 [shape = 'u8[24576]{0}', space=vmem, size = 0x6000, scoped, tag = 'output window, operand 1, single buffered']
    #allocation10 [shape = 's32[1]{0}', space=sflag, size = 0x4, scoped, tag = 'scoped memory for tpu_custom_call.1']
    %10 = vsyncpa [#allocation3], 0
    %11 = vsyncpa [#allocation6], 0
    %12 = vsyncpa [#allocation4], 0
    %13 = vsyncpa [#allocation10], 0
    // Predicated region
    $region2: #{tpu_custom_call.1} parent=1 // pred_check
      _
    $region3: #{tpu_custom_call.1} parent=1 // pred_check_branch
      %15 = sbr.rel (0) target = $region5
    $region4: #{tpu_custom_call.1} parent=1 // pred_region
      %s17 = ssub.s32 768, 768
      %18 = vsyncadd [#allocation3], %s17
      %s19 = sshll.u32 [#allocation2], 4
      %s20 = int_to_ptr.vmem [resolvable:$true] %s19
      %25 = dma.hbm_to_vmem [thread:$0]  %s0, 768, %s20, [#allocation3], 128, 128, 8
    $region5: #{tpu_custom_call.1} parent=1 // pred_fallthru
      _
    // Predicated region
    $region6: #{tpu_custom_call.1} parent=1 // pred_check
      _
    $region7: #{tpu_custom_call.1} parent=1 // pred_check_branch
      %27 = sbr.rel (0) target = $region9
    $region8: #{tpu_custom_call.1} parent=1 // pred_region
      %s29 = ssub.s32 3072, 3072
      %30 = vsyncadd [#allocation6], %s29
      %s31 = sshll.u32 [#allocation5], 4
      %s32 = int_to_ptr.vmem [resolvable:$true] %s31
      %37 = dma.hbm_to_vmem [thread:$0]  %s1, 3072, %s32, [#allocation6], 64, 64, 4
    $region9: #{tpu_custom_call.1} parent=1 // pred_fallthru
      _
    // Predicated region
    $region10: #{tpu_custom_call.1} parent=1 // pred_check
      _
    $region11: #{tpu_custom_call.1} parent=1 // pred_check_branch
      %39 = sbr.rel (0) target = $region13
    $region12: #{tpu_custom_call.1} parent=1 // pred_region
      %s41 = ssub.s32 64, 64
      %42 = vsyncadd [#allocation6], %s41
      %s44 = sshll.u32 [#allocation7], 4
      %s45 = int_to_ptr.vmem [resolvable:$true] %s44
      %47 = dma.hbm_to_vmem [thread:$0]  %s2, 64, %s45, [#allocation6]
    $region13: #{tpu_custom_call.1} parent=1 // pred_fallthru
      _
    // Predicated region
    $region14: #{tpu_custom_call.1} parent=1 // pred_check
      _
    $region15: #{tpu_custom_call.1} parent=1 // pred_check_branch
      %49 = sbr.rel (0) target = $region17
    $region16: #{tpu_custom_call.1} parent=1 // pred_region
      %50 = dma.done [#allocation3], 768
    $region17: #{tpu_custom_call.1} parent=1 // pred_fallthru
      _
    // Predicated region
    $region18: #{tpu_custom_call.1} parent=1 // pred_check
      _
    $region19: #{tpu_custom_call.1} parent=1 // pred_check_branch
      %52 = sbr.rel (0) target = $region21
    $region20: #{tpu_custom_call.1} parent=1 // pred_region
      %53 = dma.done [#allocation6], 3072
    $region21: #{tpu_custom_call.1} parent=1 // pred_fallthru
      _
    // Predicated region
    $region22: #{tpu_custom_call.1} parent=1 // pred_check
      _
    $region23: #{tpu_custom_call.1} parent=1 // pred_check_branch
      %55 = sbr.rel (0) target = $region25
    $region24: #{tpu_custom_call.1} parent=1 // pred_region
      %56 = dma.done [#allocation6], 64
    $region25: #{tpu_custom_call.1} parent=1 // pred_fallthru
      _
    %v58 = vld [vmem:[#allocation2] sm:$0xff]
    %v59 = vld [vmem:[#allocation2 + $0x8] sm:$0xff]
    %v60 = vld [vmem:[#allocation2 + $0x10] sm:$0xff]
    %v61 = vld [vmem:[#allocation2 + $0x18] sm:$0xff]
    %v62 = vld [vmem:[#allocation2 + $0x20] sm:$0xff]
    %v63 = vld [vmem:[#allocation2 + $0x28] sm:$0xff]
    %v64 = vld [vmem:[#allocation5] sm:$0xf]
    %v65 = vld [vmem:[#allocation5 + $0x4] sm:$0xf]
    %v66 = vld [vmem:[#allocation5 + $0x8] sm:$0xf]
    %v67 = vld [vmem:[#allocation5 + $0xc] sm:$0xf]
    %v68 = vld [vmem:[#allocation5 + $0x10] sm:$0xf]
    %v69 = vld [vmem:[#allocation5 + $0x14] sm:$0xf]
    %v70 = vld [vmem:[#allocation5 + $0x18] sm:$0xf]
    %v71 = vld [vmem:[#allocation5 + $0x1c] sm:$0xf]
    %v72 = vld [vmem:[#allocation5 + $0x20] sm:$0xf]
    %v73 = vld [vmem:[#allocation5 + $0x24] sm:$0xf]
    %v74 = vld [vmem:[#allocation5 + $0x28] sm:$0xf]
    %v75 = vld [vmem:[#allocation5 + $0x2c] sm:$0xf]
    %v76 = vld [vmem:[#allocation5 + $0x30] sm:$0xf]
    %v77 = vld [vmem:[#allocation5 + $0x34] sm:$0xf]
    %v78 = vld [vmem:[#allocation5 + $0x38] sm:$0xf]
    %v79 = vld [vmem:[#allocation5 + $0x3c] sm:$0xf]
    %s80 = scalar_lea.vmem [#allocation5], 64
    %v81 = vld [vmem:[%s80] sm:$0xf]
    %v82 = vld [vmem:[%s80 + $0x4] sm:$0xf]
    %v83 = vld [vmem:[%s80 + $0x8] sm:$0xf]
    %v84 = vld [vmem:[%s80 + $0xc] sm:$0xf]
    %v85 = vld [vmem:[%s80 + $0x10] sm:$0xf]
    %v86 = vld [vmem:[%s80 + $0x14] sm:$0xf]
    %v87 = vld [vmem:[%s80 + $0x18] sm:$0xf]
    %v88 = vld [vmem:[%s80 + $0x1c] sm:$0xf]
    %v89 = vld [vmem:[%s80 + $0x20] sm:$0xf]
    %v90 = vld [vmem:[%s80 + $0x24] sm:$0xf]
    %v91 = vld [vmem:[%s80 + $0x28] sm:$0xf]
    %v92 = vld [vmem:[%s80 + $0x2c] sm:$0xf]
    %v93 = vld [vmem:[%s80 + $0x30] sm:$0xf]
    %v94 = vld [vmem:[%s80 + $0x34] sm:$0xf]
    %v95 = vld [vmem:[%s80 + $0x38] sm:$0xf]
    %v96 = vld [vmem:[%s80 + $0x3c] sm:$0xf]
    %s97 = scalar_lea.vmem [#allocation5], 128
    %v98 = vld [vmem:[%s97] sm:$0xf]
    %v99 = vld [vmem:[%s97 + $0x4] sm:$0xf]
    %v100 = vld [vmem:[%s97 + $0x8] sm:$0xf]
    %v101 = vld [vmem:[%s97 + $0xc] sm:$0xf]
    %v102 = vld [vmem:[%s97 + $0x10] sm:$0xf]
    %v103 = vld [vmem:[%s97 + $0x14] sm:$0xf]
    %v104 = vld [vmem:[%s97 + $0x18] sm:$0xf]
    %v105 = vld [vmem:[%s97 + $0x1c] sm:$0xf]
    %v106 = vld [vmem:[%s97 + $0x20] sm:$0xf]
    %v107 = vld [vmem:[%s97 + $0x24] sm:$0xf]
    %v108 = vld [vmem:[%s97 + $0x28] sm:$0xf]
    %v109 = vld [vmem:[%s97 + $0x2c] sm:$0xf]
    %v110 = vld [vmem:[%s97 + $0x30] sm:$0xf]
    %v111 = vld [vmem:[%s97 + $0x34] sm:$0xf]
    %v112 = vld [vmem:[%s97 + $0x38] sm:$0xf]
    %v113 = vld [vmem:[%s97 + $0x3c] sm:$0xf]
    %v114 = vld [vmem:[#allocation7] sm:$0x1]
    %v115 = vld [vmem:[#allocation7 + $0x1] sm:$0x1]
    %v116 = vld [vmem:[#allocation7 + $0x2] sm:$0x1]
    %v117 = vpack.c.bf16 %v59, %v58
    %v118 = vpack.c.bf16 %v61, %v60
    %v119 = vpack.c.bf16 %v63, %v62
    %v120 = vlaneseq
    %v121 = vshrl.u32 %v120, 7
    %v122 = vsub.s32 0, %v121
    %v123 = vrot.slane %v114, %v122
    %v140 = vunpack.c.l.b16 %v64
    %v141 = vunpack.c.l.b16 %v65
    %v142 = vunpack.c.l.b16 %v66
    %v143 = vunpack.c.l.b16 %v67
    %v144 = vunpack.c.l.b16 %v68
    %v145 = vunpack.c.l.b16 %v69
    %v146 = vunpack.c.l.b16 %v70
    %v147 = vunpack.c.l.b16 %v71
    %v148 = vunpack.c.l.b16 %v72
    %v149 = vunpack.c.l.b16 %v73
    %v150 = vunpack.c.l.b16 %v74
    %v151 = vunpack.c.l.b16 %v75
    %v152 = vunpack.c.l.b16 %v76
    %v153 = vunpack.c.l.b16 %v77
    %v154 = vunpack.c.l.b16 %v78
    %v155 = vunpack.c.l.b16 %v79
    %v156 = vpack.c.b16 %v141, %v140
    %v157 = vpack.c.b16 %v143, %v142
    %v158 = vpack.c.b16 %v145, %v144
    %v159 = vpack.c.b16 %v147, %v146
    %v160 = vpack.c.b16 %v149, %v148
    %v161 = vpack.c.b16 %v151, %v150
    %v162 = vpack.c.b16 %v153, %v152
    %v163 = vpack.c.b16 %v155, %v154
    %172 = vmatprep.subr.bf16.mxu0 0
    %173 = vmatpush1.bf16.msra.mxu0 %v163
    %174 = vmatprep.subr.bf16.mxu0 0
    %175 = vmatpush1.bf16.msra.mxu0 %v162
    %176 = vmatprep.subr.bf16.mxu0 0
    %177 = vmatpush1.bf16.msra.mxu0 %v161
    %178 = vmatprep.subr.bf16.mxu0 0
    %179 = vmatpush1.bf16.msra.mxu0 %v160
    %180 = vmatprep.subr.bf16.mxu0 0
    %181 = vmatpush1.bf16.msra.mxu0 %v159
    %182 = vmatprep.subr.bf16.mxu0 0
    %183 = vmatpush1.bf16.msra.mxu0 %v158
    %184 = vmatprep.subr.bf16.mxu0 0
    %185 = vmatpush1.bf16.msra.mxu0 %v157
    %186 = vmatprep.subr.bf16.mxu0 0
    %187 = vmatpush1.bf16.msra.mxu0 %v156
    %188 = vmatprep.subr.bf16.mxu0 0
    %189 = vmatpush2.bf16.msra.mxu0 0
    %190 = vmatprep.subr.bf16.mxu0 0
    %191 = vmatpush2.bf16.msra.mxu0 0
    %192 = vmatprep.subr.bf16.mxu0 0
    %193 = vmatpush2.bf16.msra.mxu0 0
    %194 = vmatprep.subr.bf16.mxu0 0
    %195 = vmatpush2.bf16.msra.mxu0 0
    %196 = vmatprep.subr.bf16.mxu0 0
    %197 = vmatpush2.bf16.msra.mxu0 0
    %198 = vmatprep.subr.bf16.mxu0 0
    %199 = vmatpush2.bf16.msra.mxu0 0
    %200 = vmatprep.subr.bf16.mxu0 0
    %201 = vmatpush2.bf16.msra.mxu0 0
    %202 = vmatprep.subr.bf16.mxu0 0
    %203 = vmatpush2.bf16.msra.mxu0 0
    %204 = vmatprep.mubr.bf16.mxu0 0
    %205 = vmatmul.mubr.bf16.gmra.mxu0 %v117
    %v206 = vpop.f32.mrf.mxu0
    %v207 = vadd.f32 %v123, %v206
    %v208 = vpop.f32.mrf.mxu0
    %v209 = vpop.f32.mrf.mxu0
    %v210 = vadd.f32 %v123, %v209
    %v211 = vpop.f32.mrf.mxu0
    %212 = vmatprep.mubr.bf16.mxu0 0
    %213 = vmatmul.mubr.bf16.gmra.mxu0 %v118
    %v214 = vpop.f32.mrf.mxu0
    %v215 = vadd.f32 %v123, %v214
    %v216 = vpop.f32.mrf.mxu0
    %v217 = vpop.f32.mrf.mxu0
    %v218 = vadd.f32 %v123, %v217
    %v219 = vpop.f32.mrf.mxu0
    %220 = vmatprep.mubr.bf16.mxu0 0
    %221 = vmatmul.mubr.bf16.gmra.mxu0 %v119
    %v222 = vpop.f32.mrf.mxu0
    %v223 = vadd.f32 %v123, %v222
    %v224 = vpop.f32.mrf.mxu0
    %v225 = vpop.f32.mrf.mxu0
    %v226 = vadd.f32 %v123, %v225
    %v227 = vpop.f32.mrf.mxu0
    %228 = vdwg.mxu0
    %v229 = vmax.f32 %v207, 0.0
    %v230 = vmax.f32 %v210, 0.0
    %v231 = vmax.f32 %v215, 0.0
    %v232 = vmax.f32 %v218, 0.0
    %v233 = vmax.f32 %v223, 0.0
    %v234 = vmax.f32 %v226, 0.0
    %v235 = vpack.c.bf16 %v230, %v229
    %v236 = vpack.c.bf16 %v232, %v231
    %v237 = vpack.c.bf16 %v234, %v233
    %v238 = vlaneseq
    %v239 = vshrl.u32 %v238, 7
    %v240 = vsub.s32 0, %v239
    %v241 = vrot.slane %v115, %v240
    %v258 = vunpack.c.l.b16 %v81
    %v259 = vunpack.c.l.b16 %v82
    %v260 = vunpack.c.l.b16 %v83
    %v261 = vunpack.c.l.b16 %v84
    %v262 = vunpack.c.l.b16 %v85
    %v263 = vunpack.c.l.b16 %v86
    %v264 = vunpack.c.l.b16 %v87
    %v265 = vunpack.c.l.b16 %v88
    %v266 = vunpack.c.l.b16 %v89
    %v267 = vunpack.c.l.b16 %v90
    %v268 = vunpack.c.l.b16 %v91
    %v269 = vunpack.c.l.b16 %v92
    %v270 = vunpack.c.l.b16 %v93
    %v271 = vunpack.c.l.b16 %v94
    %v272 = vunpack.c.l.b16 %v95
    %v273 = vunpack.c.l.b16 %v96
    %v274 = vpack.c.b16 %v259, %v258
    %v275 = vpack.c.b16 %v261, %v260
    %v276 = vpack.c.b16 %v263, %v262
    %v277 = vpack.c.b16 %v265, %v264
    %v278 = vpack.c.b16 %v267, %v266
    %v279 = vpack.c.b16 %v269, %v268
    %v280 = vpack.c.b16 %v271, %v270
    %v281 = vpack.c.b16 %v273, %v272
    %290 = vmatprep.subr.bf16.mxu0 0
    %291 = vmatpush1.bf16.msra.mxu0 %v281
    %292 = vmatprep.subr.bf16.mxu0 0
    %293 = vmatpush1.bf16.msra.mxu0 %v280
    %294 = vmatprep.subr.bf16.mxu0 0
    %295 = vmatpush1.bf16.msra.mxu0 %v279
    %296 = vmatprep.subr.bf16.mxu0 0
    %297 = vmatpush1.bf16.msra.mxu0 %v278
    %298 = vmatprep.subr.bf16.mxu0 0
    %299 = vmatpush1.bf16.msra.mxu0 %v277
    %300 = vmatprep.subr.bf16.mxu0 0
    %301 = vmatpush1.bf16.msra.mxu0 %v276
    %302 = vmatprep.subr.bf16.mxu0 0
    %303 = vmatpush1.bf16.msra.mxu0 %v275
    %304 = vmatprep.subr.bf16.mxu0 0
    %305 = vmatpush1.bf16.msra.mxu0 %v274
    %306 = vmatprep.subr.bf16.mxu0 0
    %307 = vmatpush2.bf16.msra.mxu0 0
    %308 = vmatprep.subr.bf16.mxu0 0
    %309 = vmatpush2.bf16.msra.mxu0 0
    %310 = vmatprep.subr.bf16.mxu0 0
    %311 = vmatpush2.bf16.msra.mxu0 0
    %312 = vmatprep.subr.bf16.mxu0 0
    %313 = vmatpush2.bf16.msra.mxu0 0
    %314 = vmatprep.subr.bf16.mxu0 0
    %315 = vmatpush2.bf16.msra.mxu0 0
    %316 = vmatprep.subr.bf16.mxu0 0
    %317 = vmatpush2.bf16.msra.mxu0 0
    %318 = vmatprep.subr.bf16.mxu0 0
    %319 = vmatpush2.bf16.msra.mxu0 0
    %320 = vmatprep.subr.bf16.mxu0 0
    %321 = vmatpush2.bf16.msra.mxu0 0
    %322 = vmatprep.mubr.bf16.mxu0 0
    %323 = vmatmul.mubr.bf16.gmra.mxu0 %v235
    %v324 = vpop.f32.mrf.mxu0
    %v325 = vadd.f32 %v241, %v324
    %v326 = vpop.f32.mrf.mxu0
    %v327 = vpop.f32.mrf.mxu0
    %v328 = vadd.f32 %v241, %v327
    %v329 = vpop.f32.mrf.mxu0
    %330 = vmatprep.mubr.bf16.mxu0 0
    %331 = vmatmul.mubr.bf16.gmra.mxu0 %v236
    %v332 = vpop.f32.mrf.mxu0
    %v333 = vadd.f32 %v241, %v332
    %v334 = vpop.f32.mrf.mxu0
    %v335 = vpop.f32.mrf.mxu0
    %v336 = vadd.f32 %v241, %v335
    %v337 = vpop.f32.mrf.mxu0
    %338 = vmatprep.mubr.bf16.mxu0 0
    %339 = vmatmul.mubr.bf16.gmra.mxu0 %v237
    %v340 = vpop.f32.mrf.mxu0
    %v341 = vadd.f32 %v241, %v340
    %v342 = vpop.f32.mrf.mxu0
    %v343 = vpop.f32.mrf.mxu0
    %v344 = vadd.f32 %v241, %v343
    %v345 = vpop.f32.mrf.mxu0
    %346 = vdwg.mxu0
    %v347 = vmax.f32 %v325, 0.0
    %v348 = vmax.f32 %v328, 0.0
    %v349 = vmax.f32 %v333, 0.0
    %v350 = vmax.f32 %v336, 0.0
    %v351 = vmax.f32 %v341, 0.0
    %v352 = vmax.f32 %v344, 0.0
    %v353 = vpack.c.bf16 %v348, %v347
    %v354 = vpack.c.bf16 %v350, %v349
    %v355 = vpack.c.bf16 %v352, %v351
    %v356 = vlaneseq
    %v357 = vshrl.u32 %v356, 7
    %v358 = vsub.s32 0, %v357
    %v359 = vrot.slane %v116, %v358
    %v376 = vunpack.c.l.b16 %v98
    %v377 = vunpack.c.l.b16 %v99
    %v378 = vunpack.c.l.b16 %v100
    %v379 = vunpack.c.l.b16 %v101
    %v380 = vunpack.c.l.b16 %v102
    %v381 = vunpack.c.l.b16 %v103
    %v382 = vunpack.c.l.b16 %v104
    %v383 = vunpack.c.l.b16 %v105
    %v384 = vunpack.c.l.b16 %v106
    %v385 = vunpack.c.l.b16 %v107
    %v386 = vunpack.c.l.b16 %v108
    %v387 = vunpack.c.l.b16 %v109
    %v388 = vunpack.c.l.b16 %v110
    %v389 = vunpack.c.l.b16 %v111
    %v390 = vunpack.c.l.b16 %v112
    %v391 = vunpack.c.l.b16 %v113
    %v392 = vpack.c.b16 %v377, %v376
    %v393 = vpack.c.b16 %v379, %v378
    %v394 = vpack.c.b16 %v381, %v380
    %v395 = vpack.c.b16 %v383, %v382
    %v396 = vpack.c.b16 %v385, %v384
    %v397 = vpack.c.b16 %v387, %v386
    %v398 = vpack.c.b16 %v389, %v388
    %v399 = vpack.c.b16 %v391, %v390
    %408 = vmatprep.subr.bf16.mxu0 0
    %409 = vmatpush1.bf16.msra.mxu0 %v399
    %410 = vmatprep.subr.bf16.mxu0 0
    %411 = vmatpush1.bf16.msra.mxu0 %v398
    %412 = vmatprep.subr.bf16.mxu0 0
    %413 = vmatpush1.bf16.msra.mxu0 %v397
    %414 = vmatprep.subr.bf16.mxu0 0
    %415 = vmatpush1.bf16.msra.mxu0 %v396
    %416 = vmatprep.subr.bf16.mxu0 0
    %417 = vmatpush1.bf16.msra.mxu0 %v395
    %418 = vmatprep.subr.bf16.mxu0 0
    %419 = vmatpush1.bf16.msra.mxu0 %v394
    %420 = vmatprep.subr.bf16.mxu0 0
    %421 = vmatpush1.bf16.msra.mxu0 %v393
    %422 = vmatprep.subr.bf16.mxu0 0
    %423 = vmatpush1.bf16.msra.mxu0 %v392
    %424 = vmatprep.subr.bf16.mxu0 0
    %425 = vmatpush2.bf16.msra.mxu0 0
    %426 = vmatprep.subr.bf16.mxu0 0
    %427 = vmatpush2.bf16.msra.mxu0 0
    %428 = vmatprep.subr.bf16.mxu0 0
    %429 = vmatpush2.bf16.msra.mxu0 0
    %430 = vmatprep.subr.bf16.mxu0 0
    %431 = vmatpush2.bf16.msra.mxu0 0
    %432 = vmatprep.subr.bf16.mxu0 0
    %433 = vmatpush2.bf16.msra.mxu0 0
    %434 = vmatprep.subr.bf16.mxu0 0
    %435 = vmatpush2.bf16.msra.mxu0 0
    %436 = vmatprep.subr.bf16.mxu0 0
    %437 = vmatpush2.bf16.msra.mxu0 0
    %438 = vmatprep.subr.bf16.mxu0 0
    %439 = vmatpush2.bf16.msra.mxu0 0
    %440 = vmatprep.mubr.bf16.mxu0 0
    %441 = vmatmul.mubr.bf16.gmra.mxu0 %v353
    %v442 = vpop.f32.mrf.mxu0
    %v443 = vadd.f32 %v359, %v442
    %v444 = vpop.f32.mrf.mxu0
    %v445 = vpop.f32.mrf.mxu0
    %v446 = vadd.f32 %v359, %v445
    %v447 = vpop.f32.mrf.mxu0
    %448 = vmatprep.mubr.bf16.mxu0 0
    %449 = vmatmul.mubr.bf16.gmra.mxu0 %v354
    %v450 = vpop.f32.mrf.mxu0
    %v451 = vadd.f32 %v359, %v450
    %v452 = vpop.f32.mrf.mxu0
    %v453 = vpop.f32.mrf.mxu0
    %v454 = vadd.f32 %v359, %v453
    %v455 = vpop.f32.mrf.mxu0
    %456 = vmatprep.mubr.bf16.mxu0 0
    %457 = vmatmul.mubr.bf16.gmra.mxu0 %v355
    %v458 = vpop.f32.mrf.mxu0
    %v459 = vadd.f32 %v359, %v458
    %v460 = vpop.f32.mrf.mxu0
    %v461 = vpop.f32.mrf.mxu0
    %v462 = vadd.f32 %v359, %v461
    %v463 = vpop.f32.mrf.mxu0
    %464 = vdwg.mxu0
    %465 = vmax.xlane.f32.xlu0 %v443
    %v466 = vpop.xlane.xlu0 %465
    %467 = vmax.xlane.f32.xlu0 %v446
    %v468 = vpop.xlane.xlu0 %467
    %469 = vmax.xlane.f32.xlu0 %v451
    %v470 = vpop.xlane.xlu0 %469
    %471 = vmax.xlane.f32.xlu0 %v454
    %v472 = vpop.xlane.xlu0 %471
    %473 = vmax.xlane.f32.xlu0 %v459
    %v474 = vpop.xlane.xlu0 %473
    %475 = vmax.xlane.f32.xlu0 %v462
    %v476 = vpop.xlane.xlu0 %475
    %v477 = vsub.f32 %v443, %v466
    %v478 = vsub.f32 %v446, %v468
    %v479 = vsub.f32 %v451, %v470
    %v480 = vsub.f32 %v454, %v472
    %v481 = vsub.f32 %v459, %v474
    %v482 = vsub.f32 %v462, %v476
    %v483 = vmul.f32 %v477, 1.442695
    %v484 = vpow.pop %v483
    %v485 = vmul.f32 %v478, 1.442695
    %v486 = vpow.pop %v485
    %v487 = vmul.f32 %v479, 1.442695
    %v488 = vpow.pop %v487
    %v489 = vmul.f32 %v480, 1.442695
    %v490 = vpow.pop %v489
    %v491 = vmul.f32 %v481, 1.442695
    %v492 = vpow.pop %v491
    %v493 = vmul.f32 %v482, 1.442695
    %v494 = vpow.pop %v493
    %495 = vadd.xlane.f32.xlu0 %v484
    %v496 = vpop.xlane.xlu0 %495
    %497 = vadd.xlane.f32.xlu0 %v486
    %v498 = vpop.xlane.xlu0 %497
    %499 = vadd.xlane.f32.xlu0 %v488
    %v500 = vpop.xlane.xlu0 %499
    %501 = vadd.xlane.f32.xlu0 %v490
    %v502 = vpop.xlane.xlu0 %501
    %503 = vadd.xlane.f32.xlu0 %v492
    %v504 = vpop.xlane.xlu0 %503
    %505 = vadd.xlane.f32.xlu0 %v494
    %v506 = vpop.xlane.xlu0 %505
    %v507 = vrcp.pop %v496
    %v508 = vmul.f32 41.0, %v507
    %v509 = vrcp.pop %v498
    %v510 = vmul.f32 41.0, %v509
    %v511 = vrcp.pop %v500
    %v512 = vmul.f32 41.0, %v511
    %v513 = vrcp.pop %v502
    %v514 = vmul.f32 41.0, %v513
    %v515 = vrcp.pop %v504
    %v516 = vmul.f32 41.0, %v515
    %v517 = vrcp.pop %v506
    %v518 = vmul.f32 41.0, %v517
    %v519 = vmul.f32 %v484, %v508
    %v520 = vmul.f32 %v486, %v510
    %v521 = vmul.f32 %v488, %v512
    %v522 = vmul.f32 %v490, %v514
    %v523 = vmul.f32 %v492, %v516
    %v524 = vmul.f32 %v494, %v518
    %525 = vst [vmem:[#allocation8] sm:$0xff] %v519
    %526 = vst [vmem:[#allocation8 + $0x8] sm:$0xff] %v520
    %527 = vst [vmem:[#allocation8 + $0x10] sm:$0xff] %v521
    %528 = vst [vmem:[#allocation8 + $0x18] sm:$0xff] %v522
    %529 = vst [vmem:[#allocation8 + $0x20] sm:$0xff] %v523
    %530 = vst [vmem:[#allocation8 + $0x28] sm:$0xff] %v524
    %v531 = vmul.f32 %v58, %v519
    %v532 = vmul.f32 %v59, %v520
    %v533 = vmul.f32 %v60, %v521
    %v534 = vmul.f32 %v61, %v522
    %v535 = vmul.f32 %v62, %v523
    %v536 = vmul.f32 %v63, %v524
    %537 = vst [vmem:[#allocation9] sm:$0xff] %v531
    %538 = vst [vmem:[#allocation9 + $0x8] sm:$0xff] %v532
    %539 = vst [vmem:[#allocation9 + $0x10] sm:$0xff] %v533
    %540 = vst [vmem:[#allocation9 + $0x18] sm:$0xff] %v534
    %541 = vst [vmem:[#allocation9 + $0x20] sm:$0xff] %v535
    %542 = vst [vmem:[#allocation9 + $0x28] sm:$0xff] %v536
    // Predicated region
    $region26: #{tpu_custom_call.1} parent=1 // pred_check
      _
    $region27: #{tpu_custom_call.1} parent=1 // pred_check_branch
      %544 = sbr.rel (0) target = $region29
    $region28: #{tpu_custom_call.1} parent=1 // pred_region
      %s546 = ssub.s32 768, 768
      %547 = vsyncadd [#allocation4], %s546
      %s548 = sshll.u32 [#allocation8], 4
      %s549 = int_to_ptr.vmem [resolvable:$true] %s548
      %554 = dma.vmem_to_hbm [thread:$0]  %s549, 768, %s3, [#allocation4], 128, 128, 8
    $region29: #{tpu_custom_call.1} parent=1 // pred_fallthru
      _
    // Predicated region
    $region30: #{tpu_custom_call.1} parent=1 // pred_check
      _
    $region31: #{tpu_custom_call.1} parent=1 // pred_check_branch
      %556 = sbr.rel (0) target = $region33
    $region32: #{tpu_custom_call.1} parent=1 // pred_region
      %s558 = ssub.s32 768, 768
      %559 = vsyncadd [#allocation10], %s558
      %s560 = sshll.u32 [#allocation9], 4
      %s561 = int_to_ptr.vmem [resolvable:$true] %s560
      %566 = dma.vmem_to_hbm [thread:$0]  %s561, 768, %s4, [#allocation10], 128, 128, 8
    $region33: #{tpu_custom_call.1} parent=1 // pred_fallthru
      _
    // Predicated region
    $region34: #{tpu_custom_call.1} parent=1 // pred_check
      _
    $region35: #{tpu_custom_call.1} parent=1 // pred_check_branch
      %568 = sbr.rel (0) target = $region37
    $region36: #{tpu_custom_call.1} parent=1 // pred_region
      %569 = dma.done [#allocation4], 768
    $region37: #{tpu_custom_call.1} parent=1 // pred_fallthru
      _
    // Predicated region
    $region38: #{tpu_custom_call.1} parent=1 // pred_check
      _
    $region39: #{tpu_custom_call.1} parent=1 // pred_check_branch
      %571 = sbr.rel (0) target = $region41
    $region40: #{tpu_custom_call.1} parent=1 // pred_region
      %572 = dma.done [#allocation10], 768
    $region41: #{tpu_custom_call.1} parent=1 // pred_fallthru
      _
    %573 = vsyncpa [#allocation3], 1
    %574 = vsyncpa [#allocation6], 1
    %575 = vsyncpa [#allocation4], 1
    %576 = vsyncpa [#allocation10], 1

</llo_original>
